<compile_context>
chip_gen: v5e
topology: v5e:2x2
jax: 0.10.0
libtpu: 0.0.40
codegen_flags: <defaults>
</compile_context>

<pallas_src>
import functools

import jax
import jax.numpy as jnp
from jax.experimental import pallas as pl
from jax.experimental.pallas import tpu as pltpu


def _round_up(x, m):
    return ((x + m - 1) // m) * m


def _row_mean_kernel(x_ref, o_ref, acc_ref, *, hw, inv_hw, needs_mask, single_k):
    # x_ref: (tr, tk)   o_ref: (tr, 1)   acc_ref: (tr, 128) f32 lane-dense partial sums
    k = pl.program_id(1)
    nk = pl.num_programs(1)
    tr, tk = x_ref.shape
    nchunks = tk // 128

    # Number of valid columns in this k block (static when the k grid has a single step).
    rem = hw if single_k else hw - k * tk
    if needs_mask:
        base_col = jax.lax.broadcasted_iota(jnp.int32, (tr, 128), 1)

    # Lane-dense partial sum over the tk columns: pure VPU adds, no per-step XLU reduce.
    partial = None
    for c in range(nchunks):
        chunk = x_ref[:, pl.ds(c * 128, 128)].astype(jnp.float32)
        if needs_mask and (not single_k or (c + 1) * 128 > hw):
            chunk = jnp.where(base_col < (rem - c * 128), chunk, 0.0)
        partial = chunk if partial is None else partial + chunk

    @pl.when(k == 0)
    def _():
        acc_ref[...] = partial          # init folded into first accumulate

    @pl.when(k != 0)
    def _():
        acc_ref[...] = acc_ref[...] + partial

    @pl.when(k == nk - 1)
    def _():
        # Single cross-lane reduce + reciprocal multiply, only at finalize.
        row_sum = jnp.sum(acc_ref[...], axis=-1, keepdims=True)
        o_ref[...] = (row_sum * inv_hw).astype(o_ref.dtype)


def pooled_skip(x, output_spatial_size, *, block_bytes=8 << 20,
                lane_tile_cap=4096, max_row_tile=1024):
    """x: (N, C, H, W) -> (N, C, S, S); every spatial position equals mean over (H, W)."""
    N, C, H, W = x.shape
    S = int(output_spatial_size)
    R, HW = N * C, H * W
    itemsize = jnp.dtype(x.dtype).itemsize

    x_flat = x.reshape(R, HW)

    lane = 128
    row_align = max(8, 32 // itemsize)                 # 8 f32 / 16 bf16 / 32 int8
    hw_pad = _round_up(HW, lane)

    # Lane tile: multiple of 128; capped so the unrolled 128-lane chunk loop stays short.
    lane_tile_cap = max(lane, (lane_tile_cap // lane) * lane)
    tk = min(hw_pad, lane_tile_cap)

    # Row tile: multiple of the sublane alignment, sized so that
    #   (a) the parallel row axis has >= 4 tiles when R allows (v7x megacore sharding),
    #   (b) the input block stays within the per-step byte budget (~8 MiB: safe on
    #       v7x's 64 MiB VMEM, amortizes the ~0.35 us per-step overhead on all gens),
    #   (c) it never exceeds the (aligned) row extent.
    max_row_tile = max(row_align, (max_row_tile // row_align) * row_align)
    budget_rows = max(row_align, (block_bytes // (tk * itemsize)) // row_align * row_align)
    tr = min(_round_up(R, row_align),
             _round_up(-(-R // 4), row_align),
             min(max_row_tile, budget_rows))
    tr = max(tr, row_align)

    grid = (pl.cdiv(R, tr), pl.cdiv(HW, tk))
    needs_mask = (HW % tk) != 0          # ragged trailing k block -> mask in-kernel
    single_k = grid[1] == 1

    means = pl.pallas_call(
        functools.partial(_row_mean_kernel, hw=HW, inv_hw=1.0 / HW,
                          needs_mask=needs_mask, single_k=single_k),
        out_shape=jax.ShapeDtypeStruct((R, 1), x.dtype),
        grid_spec=pltpu.PrefetchScalarGridSpec(
            num_scalar_prefetch=0,
            grid=grid,
            in_specs=[pl.BlockSpec((tr, tk), lambda i, k: (i, k))],
            out_specs=pl.BlockSpec((tr, 1), lambda i, k: (i, 0)),
            scratch_shapes=[pltpu.VMEM((tr, 128), jnp.float32)],
        ),
        compiler_params=pltpu.CompilerParams(
            dimension_semantics=("parallel", "arbitrary"),
            # 2 x 8 MiB double-buffered input + (tr,128) f32 scratch + tiny output
            # fits comfortably under 32 MiB on v5e/v6e/v7x.
            vmem_limit_bytes=32 << 20,
        ),
    )(x_flat)

    means = means.reshape(N, C, 1, 1)
    # Spatial "repeat" deferred to XLA: fuses into the consumer, avoids S*S x HBM writes.
    return jnp.broadcast_to(means, (N, C, S, S))


def pooled_skip_ref(x, output_spatial_size):
    m = jnp.mean(x, axis=(2, 3), keepdims=True)
    return jnp.broadcast_to(
        m, (x.shape[0], x.shape[1], output_spatial_size, output_spatial_size)
    )


if __name__ == "__main__":
    key = jax.random.PRNGKey(0)

    # Case 1: tile-aligned shapes.
    N, C, H, W = 2, 4, 16, 16
    S = 8
    x = jax.random.normal(key, (N, C, H, W), dtype=jnp.float32)
    out = jax.block_until_ready(pooled_skip(x, S))
    ref = pooled_skip_ref(x, S)
    assert out.shape == (N, C, S, S), out.shape
    assert jnp.allclose(out, ref, atol=1e-5, rtol=1e-5), "mismatch vs reference (aligned)"

    # Case 2: ragged rows (N*C not a multiple of 8) and ragged lanes (H*W not a
    # multiple of 128) -> exercises the in-kernel mask + clipped writeback paths.
    x2 = jax.random.normal(jax.random.PRNGKey(1), (2, 3, 15, 15), dtype=jnp.float32)
    out2 = jax.block_until_ready(pooled_skip(x2, 4))
    ref2 = pooled_skip_ref(x2, 4)
    assert out2.shape == (2, 3, 4, 4), out2.shape
    assert jnp.allclose(out2, ref2, atol=1e-5, rtol=1e-5), "mismatch vs reference (ragged)"

    print("KERNEL_OK")
</pallas_src>

<mosaic_0001>
module attributes {stable_mosaic.version = 11 : i64} {
  func.func @_row_mean_kernel(%arg0: i32, %arg1: i32, %arg2: memref<8x256xf32, #tpu.memory_space<vmem>>, %arg3: memref<8x1xf32, #tpu.memory_space<vmem>>, %arg4: memref<8x128xf32, #tpu.memory_space<vmem>>) attributes {dimension_semantics = [#tpu.dimension_semantics<parallel>, #tpu.dimension_semantics<arbitrary>], iteration_bounds = array<i64: 1, 1>, scalar_prefetch = 0 : i64, scratch_operands = 1 : i64, tpu.core_type = #tpu.core_type<tc>, window_params = [{transform_indices = @transform_0, window_bounds = array<i64: 8, 256>}, {transform_indices = @transform_1, window_bounds = array<i64: 8, 1>}]} {
    %c0 = arith.constant 0 : index
    %c0_0 = arith.constant 0 : index
    %0 = vector.load %arg2[%c0, %c0_0] : memref<8x256xf32, #tpu.memory_space<vmem>>, vector<8x128xf32>
    %c0_1 = arith.constant 0 : index
    %c128 = arith.constant 128 : index
    %1 = vector.load %arg2[%c0_1, %c128] : memref<8x256xf32, #tpu.memory_space<vmem>>, vector<8x128xf32>
    %2 = arith.addf %0, %1 : vector<8x128xf32>
    %c0_i32 = arith.constant 0 : i32
    %3 = arith.cmpi eq, %arg1, %c0_i32 : i32
    %4 = arith.extui %3 : i1 to i32
    %c0_i32_2 = arith.constant 0 : i32
    %5 = arith.cmpi ne, %4, %c0_i32_2 : i32
    scf.if %5 {
      %c0_7 = arith.constant 0 : index
      %c0_8 = arith.constant 0 : index
      %12 = vector.load %arg4[%c0_7, %c0_8] : memref<8x128xf32, #tpu.memory_space<vmem>>, vector<8x128xf32>
      tpu.vector_store %arg4[%c0_7, %c0_8], %2 {strides = array<i32>} : memref<8x128xf32, #tpu.memory_space<vmem>>, vector<8x128xf32>,
    } else {
    }
    %c0_i32_3 = arith.constant 0 : i32
    %6 = arith.cmpi ne, %arg1, %c0_i32_3 : i32
    %7 = arith.extui %6 : i1 to i32
    %c0_i32_4 = arith.constant 0 : i32
    %8 = arith.cmpi ne, %7, %c0_i32_4 : i32
    scf.if %8 {
      %c0_7 = arith.constant 0 : index
      %c0_8 = arith.constant 0 : index
      %12 = vector.load %arg4[%c0_7, %c0_8] : memref<8x128xf32, #tpu.memory_space<vmem>>, vector<8x128xf32>
      %13 = arith.addf %12, %2 : vector<8x128xf32>
      %c0_9 = arith.constant 0 : index
      %c0_10 = arith.constant 0 : index
      %14 = vector.load %arg4[%c0_9, %c0_10] : memref<8x128xf32, #tpu.memory_space<vmem>>, vector<8x128xf32>
      tpu.vector_store %arg4[%c0_9, %c0_10], %13 {strides = array<i32>} : memref<8x128xf32, #tpu.memory_space<vmem>>, vector<8x128xf32>,
    } else {
    }
    %c0_i32_5 = arith.constant 0 : i32
    %9 = arith.cmpi eq, %arg1, %c0_i32_5 : i32
    %10 = arith.extui %9 : i1 to i32
    %c0_i32_6 = arith.constant 0 : i32
    %11 = arith.cmpi ne, %10, %c0_i32_6 : i32
    scf.if %11 {
      %c0_7 = arith.constant 0 : index
      %c0_8 = arith.constant 0 : index
      %12 = vector.load %arg4[%c0_7, %c0_8] : memref<8x128xf32, #tpu.memory_space<vmem>>, vector<8x128xf32>
      %cst = arith.constant dense<0.000000e+00> : vector<8xf32>
      %13 = vector.multi_reduction <add>, %12, %cst [1] : vector<8x128xf32> to vector<8xf32>
      %14 = vector.shape_cast %13 : vector<8xf32> to vector<8x1xf32>
      %cst_9 = arith.constant 3.906250e-03 : f32
      %15 = vector.broadcast %cst_9 : f32 to vector<8x1xf32>
      %16 = arith.mulf %14, %15 : vector<8x1xf32>
      %c0_10 = arith.constant 0 : index
      %c0_11 = arith.constant 0 : index
      %17 = vector.load %arg3[%c0_10, %c0_11] : memref<8x1xf32, #tpu.memory_space<vmem>>, vector<8x1xf32>
      tpu.vector_store %arg3[%c0_10, %c0_11], %16 {strides = array<i32>} : memref<8x1xf32, #tpu.memory_space<vmem>>, vector<8x1xf32>,
    } else {
    }
    return
  }
  func.func @transform_0(%arg0: i32, %arg1: i32) -> (i32, i32) {
    %c0_i32 = arith.constant 0 : i32
    return %arg0, %arg1 : i32, i32
  }
  func.func @transform_1(%arg0: i32, %arg1: i32) -> (i32, i32) {
    %c0_i32 = arith.constant 0 : i32
    %c0_i32_0 = arith.constant 0 : i32
    return %arg0, %c0_i32 : i32, i32
  }
}

</mosaic_0001>

<llo_original>
// kernel: tpu_custom_call.1
$region0: #{tpu_custom_call.1}
  #allocation0 [shape = 'u32[]', space=smem, size = 0x4, offset = 0x4, fixed_abs, tag = 'smem constant byte address 0x4 - core index']
  #allocation1 [shape = 'u32[72,128]{1,0:T(1,128)}', space=vmem, size = 0x9000, scoped, tag = 'internal scratch']
  #allocation2 [shape = 'f32[8,128]{1,0:T(8,128)}', space=vmem, size = 0x1000, scoped, tag = 'scratch operand']
  %s0 = inlined_call_operand.hbm [shape: f32[8,256], index: 0, kind: input, shape index: {}]
  %s1 = inlined_call_operand.vmem [shape: f32[8,1], index: 1, kind: output, shape index: {}]
  %s2 = sld [smem:[#allocation0]]
  $region30: #{tpu_custom_call.1} parent=0
    _
  %s4 = ssub.s32 1, %s2
  %s5 = scalar_select 0, %s4, %s2
  $region1: #{tpu_custom_call.1} parent=0
    #allocation3 [shape = 'u8[8192]{0}', space=vmem, size = 0x2000, scoped, tag = 'input window, operand 0, single buffered']
    #allocation4 [shape = 's32[1]{0}', space=sflag, size = 0x4, scoped, tag = 'scoped memory for tpu_custom_call.1']
    %6 = vsyncpa [#allocation4], 0
    // Predicated region
    $region2: #{tpu_custom_call.1} parent=1 // pred_check
      _
    $region3: #{tpu_custom_call.1} parent=1 // pred_check_branch
      %8 = sbr.rel (0) target = $region5
    $region4: #{tpu_custom_call.1} parent=1 // pred_region
      %10 = vsyncadd [#allocation4], 0
      %s12 = sshll.u32 %s0, 4
      %s13 = int_to_ptr.hbm [resolvable:$true] %s12
      %s14 = sshll.u32 [#allocation3], 4
      %s15 = int_to_ptr.vmem [resolvable:$true] %s14
      %17 = dma.hbm_to_vmem [thread:$0]  %s13, 256, %s15, [#allocation4]
    $region5: #{tpu_custom_call.1} parent=1 // pred_fallthru
      _
    // Predicated region
    $region6: #{tpu_custom_call.1} parent=1 // pred_check
      _
    $region7: #{tpu_custom_call.1} parent=1 // pred_check_branch
      %19 = sbr.rel (0) target = $region9
    $region8: #{tpu_custom_call.1} parent=1 // pred_region
      %21 = dma.done [#allocation4], 256
    $region9: #{tpu_custom_call.1} parent=1 // pred_fallthru
      _
    %v22 = vld [vmem:[#allocation3] sm:$0xff]
    %v23 = vld [vmem:[#allocation3 + $0x8] sm:$0xff]
    %v24 = vadd.f32 %v22, %v23
    %p25 = scmp.eq.s32.totalorder 0, 0
    // Predicated region
    $region10: #{tpu_custom_call.1} parent=1 // pred_check
      %p26 = pneg %p25
    $region11: #{tpu_custom_call.1} parent=1 // pred_check_branch
      %28 = sbr.rel (%p26) target = $region13
    $region12: #{tpu_custom_call.1} parent=1 // pred_region
      %29 = vst [vmem:[#allocation2] sm:$0xff] %v24
    $region13: #{tpu_custom_call.1} parent=1 // pred_fallthru
      _
    %p30 = scmp.ne.s32.totalorder 0, 0
    // Predicated region
    $region14: #{tpu_custom_call.1} parent=1 // pred_check
      %p31 = pneg %p30
    $region15: #{tpu_custom_call.1} parent=1 // pred_check_branch
      %33 = sbr.rel (%p31) target = $region17
    $region16: #{tpu_custom_call.1} parent=1 // pred_region
      %v34 = vld [vmem:[#allocation2] sm:$0xff]
      %v35 = vadd.f32 %v34, %v24
      %36 = vst [vmem:[#allocation2] sm:$0xff] %v35
    $region17: #{tpu_custom_call.1} parent=1 // pred_fallthru
      _
    // Predicated region
    $region18: #{tpu_custom_call.1} parent=1 // pred_check
      %p37 = pneg %p25
    $region19: #{tpu_custom_call.1} parent=1 // pred_check_branch
      %39 = sbr.rel (%p37) target = $region21
    $region20: #{tpu_custom_call.1} parent=1 // pred_region
      %v40 = vld [vmem:[#allocation2] sm:$0xff]
      %41 = vadd.xlane.f32.xlu0 %v40
      %v42 = vpop.xlane.xlu0 %41
      %v43 = vmul.f32 %v42, 0.00390625
      %vm44 = vcmask 7168
      %45 = vst.msk [vmem:[%s1] sm:$0xff] %vm44, %v43
    $region21: #{tpu_custom_call.1} parent=1 // pred_fallthru
      _
    // Predicated region
    $region22: #{tpu_custom_call.1} parent=1 // pred_check
      _
    $region23: #{tpu_custom_call.1} parent=1 // pred_check_branch
      %47 = sbr.rel (0) target = $region25
    $region24: #{tpu_custom_call.1} parent=1 // pred_region
      _
    $region25: #{tpu_custom_call.1} parent=1 // pred_fallthru
      _
    // Predicated region
    $region26: #{tpu_custom_call.1} parent=1 // pred_check
      _
    $region27: #{tpu_custom_call.1} parent=1 // pred_check_branch
      %49 = sbr.rel (0) target = $region29
    $region28: #{tpu_custom_call.1} parent=1 // pred_region
      _
    $region29: #{tpu_custom_call.1} parent=1 // pred_fallthru
      _
    %50 = vsyncpa [#allocation4], 1

</llo_original>
